<compile_context>
chip_gen: v5e
topology: v5e:2x2
jax: 0.10.0
libtpu: 0.0.40
codegen_flags: <defaults>
</compile_context>

<pallas_src>
import jax
import jax.numpy as jnp
from jax.experimental import pallas as pl
from jax.experimental.pallas import tpu as pltpu

BN_EPS = 1e-5  # PyTorch BatchNorm1d default


# ------------------------------ fused kernel ------------------------------- #
def _bn_relu(y, bn_ref):
    """Training-mode BatchNorm1d (biased batch variance) + ReLU, folded form."""
    mean = jnp.mean(y, axis=0, keepdims=True)
    yc = y - mean
    var = jnp.mean(yc * yc, axis=0, keepdims=True)        # biased, as in torch training BN
    inv = jax.lax.rsqrt(var + BN_EPS)                      # EUP slot (cheap)
    gamma = bn_ref[0:1, :]
    beta = bn_ref[1:2, :]
    scale = gamma * inv                                    # (1, N) folding, tiny
    return jnp.maximum(yc * scale + beta, 0.0)


def vae_fused_kernel(
    # activations
    x_ref, code_ref, struc_ref, eps_ref,
    # encoder params
    wfx_ref, wfc_ref, wfs_ref, bn0_ref,
    w1_ref, bn1_ref,
    w2_ref, bn2_ref,
    w3_ref, b3_ref,
    # decoder params
    w4z_ref, w4c_ref, w4s_ref, bn4_ref,
    w5_ref, bn5_ref,
    w6_ref, bn6_ref,
    w7_ref, b7_ref,
    # outputs
    out7_ref, mu_ref, sig_ref,
):
    f32 = jnp.float32
    x = x_ref[...]
    code = code_ref[...]
    struc = struc_ref[...]

    # --- encoder -----------------------------------------------------------
    # fc on concat(x, code, struc): split-K accumulation, no concat copy.
    h = (jnp.dot(x, wfx_ref[...], preferred_element_type=f32)
         + jnp.dot(code, wfc_ref[...], preferred_element_type=f32)
         + jnp.dot(struc, wfs_ref[...], preferred_element_type=f32))
    out1 = _bn_relu(h, bn0_ref)
    out2 = _bn_relu(jnp.dot(out1, w1_ref[...], preferred_element_type=f32), bn1_ref)
    out3 = _bn_relu(jnp.dot(out2, w2_ref[...], preferred_element_type=f32), bn2_ref)

    # fused mu/sig head: one matmul against [W_mu | W_sig], then split.
    head = jnp.dot(out3, w3_ref[...], preferred_element_type=f32) + b3_ref[...]
    h3 = head.shape[1] // 2
    mu = head[:, :h3]
    sig = jnp.logaddexp(head[:, h3:], 0.0)                 # softplus (stable)
    mu_ref[...] = mu
    sig_ref[...] = sig

    # --- reparameterization: sample = mu + exp(log_var / 2) * eps -----------
    # (module passes softplus(fc3_sig(out3)) as log_var)
    z = mu + jnp.exp(sig * 0.5) * eps_ref[...]

    # --- decoder ------------------------------------------------------------
    # fc4 on concat(sample, code, struc): split-K accumulation again.
    h4 = (jnp.dot(z, w4z_ref[...], preferred_element_type=f32)
          + jnp.dot(code, w4c_ref[...], preferred_element_type=f32)
          + jnp.dot(struc, w4s_ref[...], preferred_element_type=f32))
    out4 = _bn_relu(h4, bn4_ref)
    out5 = _bn_relu(jnp.dot(out4, w5_ref[...], preferred_element_type=f32), bn5_ref)
    out6 = _bn_relu(jnp.dot(out5, w6_ref[...], preferred_element_type=f32), bn6_ref)
    out7_ref[...] = jax.nn.sigmoid(
        jnp.dot(out6, w7_ref[...], preferred_element_type=f32) + b7_ref[...])


# ------------------------------ thin wrapper -------------------------------- #
def vae_forward(params, x, code, struc, eps):
    batch = x.shape[0]
    h3 = params["fc3"]["w"].shape[1] // 2
    out_dim = params["fc7"]["w"].shape[1]

    inputs = (
        x, code, struc, eps,
        params["fc"]["w_x"], params["fc"]["w_c"], params["fc"]["w_s"], params["BN"],
        params["fc1"]["w"], params["BN1"],
        params["fc2"]["w"], params["BN2"],
        params["fc3"]["w"], params["fc3"]["b"],
        params["fc4"]["w_z"], params["fc4"]["w_c"], params["fc4"]["w_s"], params["BN4"],
        params["fc5"]["w"], params["BN5"],
        params["fc6"]["w"], params["BN6"],
        params["fc7"]["w"], params["fc7"]["b"],
    )
    vmem = lambda: pl.BlockSpec(memory_space=pltpu.MemorySpace.VMEM)
    out7, mu, sig = pl.pallas_call(
        vae_fused_kernel,
        out_shape=(
            jax.ShapeDtypeStruct((batch, out_dim), jnp.float32),
            jax.ShapeDtypeStruct((batch, h3), jnp.float32),
            jax.ShapeDtypeStruct((batch, h3), jnp.float32),
        ),
        in_specs=[vmem() for _ in range(len(inputs))],
        out_specs=(vmem(), vmem(), vmem()),
    )(*inputs)
    return out7, mu, sig


# ------------------------------- parameters --------------------------------- #
def init_linear(key, in_dim, out_dim, with_bias=True):
    """PyTorch-style uniform(-1/sqrt(in), 1/sqrt(in)) init; weight stored (in, out)."""
    kw, kb = jax.random.split(key)
    bound = 1.0 / jnp.sqrt(jnp.float32(in_dim))
    w = jax.random.uniform(kw, (in_dim, out_dim), jnp.float32, -bound, bound)
    if not with_bias:
        return w
    b = jax.random.uniform(kb, (1, out_dim), jnp.float32, -bound, bound)
    return w, b


def init_bn(dim):
    # Packed (2, dim): row 0 = gamma (weight=1), row 1 = beta (bias=0).
    return jnp.concatenate(
        [jnp.ones((1, dim), jnp.float32), jnp.zeros((1, dim), jnp.float32)], axis=0)


def init_vae_params(key, x_dim, code_dim, struc_dim, hidden_sizes):
    input_size = x_dim + code_dim + struc_dim
    code_struc = code_dim + struc_dim            # stands in for the hard-coded 1273
    h0, h1, h2, h3 = hidden_sizes
    keys = jax.random.split(key, 9)

    # Linear biases feeding training-mode BatchNorm are exactly cancelled by the
    # mean subtraction, so they are dropped here (mathematically identical).
    w_fc = init_linear(keys[0], input_size, h0, with_bias=False)
    fc = {"w_x": w_fc[:x_dim],
          "w_c": w_fc[x_dim:x_dim + code_dim],
          "w_s": w_fc[x_dim + code_dim:]}

    w1 = init_linear(keys[1], h0, h1, with_bias=False)
    w2 = init_linear(keys[2], h1, h2, with_bias=False)

    # Fused mu/sig head weights: [W_mu | W_sig] along the output axis.
    w_mu, b_mu = init_linear(keys[3], h2, h3)
    w_sig, b_sig = init_linear(keys[4], h2, h3)
    fc3 = {"w": jnp.concatenate([w_mu, w_sig], axis=1),
           "b": jnp.concatenate([b_mu, b_sig], axis=1)}

    w_fc4 = init_linear(keys[5], h3 + code_struc, h2, with_bias=False)
    fc4 = {"w_z": w_fc4[:h3],
           "w_c": w_fc4[h3:h3 + code_dim],
           "w_s": w_fc4[h3 + code_dim:]}

    w5 = init_linear(keys[6], h2, h1, with_bias=False)
    w6 = init_linear(keys[7], h1, h0, with_bias=False)
    w7, b7 = init_linear(keys[8], h0, input_size - code_struc)

    return {
        "fc": fc, "BN": init_bn(h0),
        "fc1": {"w": w1}, "BN1": init_bn(h1),
        "fc2": {"w": w2}, "BN2": init_bn(h2),
        "fc3": fc3,
        "fc4": fc4, "BN4": init_bn(h2),
        "fc5": {"w": w5}, "BN5": init_bn(h1),
        "fc6": {"w": w6}, "BN6": init_bn(h0),
        "fc7": {"w": w7, "b": b7},
    }


# ----------------------------------- main ----------------------------------- #
if __name__ == "__main__":
    # small synthetic shapes consistent with the module
    batch = 8
    x_dim = 40
    code_dim = 16
    struc_dim = 8
    hidden_sizes = (64, 48, 32, 16)

    key = jax.random.PRNGKey(0)
    kp, kx, kc, ks, ke = jax.random.split(key, 5)

    params = init_vae_params(kp, x_dim, code_dim, struc_dim, hidden_sizes)
    x = jax.random.normal(kx, (batch, x_dim), jnp.float32)
    code = jax.random.normal(kc, (batch, code_dim), jnp.float32)
    struc = jax.random.normal(ks, (batch, struc_dim), jnp.float32)
    # eps ~ N(0,1) generated in the wrapper, like torch.randn in sample_z
    eps = jax.random.normal(ke, (batch, hidden_sizes[-1]), jnp.float32)

    fwd = jax.jit(vae_forward)
    out7, mu, sig = fwd(params, x, code, struc, eps)
    jax.block_until_ready((out7, mu, sig))

    assert out7.shape == (batch, x_dim)
    assert mu.shape == (batch, hidden_sizes[-1])
    assert sig.shape == (batch, hidden_sizes[-1])
    assert bool(jnp.all(jnp.isfinite(out7)))
    assert bool(jnp.all(jnp.isfinite(mu)))
    assert bool(jnp.all(jnp.isfinite(sig)))
    print("KERNEL_OK")
</pallas_src>

<mosaic_0001>
module attributes {stable_mosaic.version = 11 : i64} {
  func.func @vae_fused_kernel(%arg0: memref<8x40xf32, #tpu.memory_space<vmem>>, %arg1: memref<8x16xf32, #tpu.memory_space<vmem>>, %arg2: memref<8x8xf32, #tpu.memory_space<vmem>>, %arg3: memref<8x16xf32, #tpu.memory_space<vmem>>, %arg4: memref<40x64xf32, #tpu.memory_space<vmem>>, %arg5: memref<16x64xf32, #tpu.memory_space<vmem>>, %arg6: memref<8x64xf32, #tpu.memory_space<vmem>>, %arg7: memref<2x64xf32, #tpu.memory_space<vmem>>, %arg8: memref<64x48xf32, #tpu.memory_space<vmem>>, %arg9: memref<2x48xf32, #tpu.memory_space<vmem>>, %arg10: memref<48x32xf32, #tpu.memory_space<vmem>>, %arg11: memref<2x32xf32, #tpu.memory_space<vmem>>, %arg12: memref<32x32xf32, #tpu.memory_space<vmem>>, %arg13: memref<1x32xf32, #tpu.memory_space<vmem>>, %arg14: memref<16x32xf32, #tpu.memory_space<vmem>>, %arg15: memref<16x32xf32, #tpu.memory_space<vmem>>, %arg16: memref<8x32xf32, #tpu.memory_space<vmem>>, %arg17: memref<2x32xf32, #tpu.memory_space<vmem>>, %arg18: memref<32x48xf32, #tpu.memory_space<vmem>>, %arg19: memref<2x48xf32, #tpu.memory_space<vmem>>, %arg20: memref<48x64xf32, #tpu.memory_space<vmem>>, %arg21: memref<2x64xf32, #tpu.memory_space<vmem>>, %arg22: memref<64x40xf32, #tpu.memory_space<vmem>>, %arg23: memref<1x40xf32, #tpu.memory_space<vmem>>, %arg24: memref<8x40xf32, #tpu.memory_space<vmem>>, %arg25: memref<8x16xf32, #tpu.memory_space<vmem>>, %arg26: memref<8x16xf32, #tpu.memory_space<vmem>>) attributes {dimension_semantics = [], scalar_prefetch = 0 : i64, scratch_operands = 0 : i64, tpu.core_type = #tpu.core_type<tc>} {
    %c0 = arith.constant 0 : index
    %c0_0 = arith.constant 0 : index
    %0 = vector.load %arg0[%c0, %c0_0] : memref<8x40xf32, #tpu.memory_space<vmem>>, vector<8x40xf32>
    %c0_1 = arith.constant 0 : index
    %c0_2 = arith.constant 0 : index
    %1 = vector.load %arg1[%c0_1, %c0_2] : memref<8x16xf32, #tpu.memory_space<vmem>>, vector<8x16xf32>
    %c0_3 = arith.constant 0 : index
    %c0_4 = arith.constant 0 : index
    %2 = vector.load %arg2[%c0_3, %c0_4] : memref<8x8xf32, #tpu.memory_space<vmem>>, vector<8x8xf32>
    %c0_5 = arith.constant 0 : index
    %c0_6 = arith.constant 0 : index
    %3 = vector.load %arg4[%c0_5, %c0_6] : memref<40x64xf32, #tpu.memory_space<vmem>>, vector<40x64xf32>
    %cst = arith.constant dense<0.000000e+00> : vector<8x64xf32>
    %4 = tpu.matmul %0, %3, %cst {dimension_numbers = #tpu.dot_dimension_numbers<[1], [0], [0], [1], [0, 0, 1, 1], [], []>} : vector<8x40xf32>, vector<40x64xf32>, vector<8x64xf32> -> vector<8x64xf32>
    %c0_7 = arith.constant 0 : index
    %c0_8 = arith.constant 0 : index
    %5 = vector.load %arg5[%c0_7, %c0_8] : memref<16x64xf32, #tpu.memory_space<vmem>>, vector<16x64xf32>
    %cst_9 = arith.constant dense<0.000000e+00> : vector<8x64xf32>
    %6 = tpu.matmul %1, %5, %cst_9 {dimension_numbers = #tpu.dot_dimension_numbers<[1], [0], [0], [1], [0, 0, 1, 1], [], []>} : vector<8x16xf32>, vector<16x64xf32>, vector<8x64xf32> -> vector<8x64xf32>
    %7 = arith.addf %4, %6 : vector<8x64xf32>
    %c0_10 = arith.constant 0 : index
    %c0_11 = arith.constant 0 : index
    %8 = vector.load %arg6[%c0_10, %c0_11] : memref<8x64xf32, #tpu.memory_space<vmem>>, vector<8x64xf32>
    %cst_12 = arith.constant dense<0.000000e+00> : vector<8x64xf32>
    %9 = tpu.matmul %2, %8, %cst_12 {dimension_numbers = #tpu.dot_dimension_numbers<[1], [0], [0], [1], [0, 0, 1, 1], [], []>} : vector<8x8xf32>, vector<8x64xf32>, vector<8x64xf32> -> vector<8x64xf32>
    %10 = arith.addf %7, %9 : vector<8x64xf32>
    %cst_13 = arith.constant dense<0.000000e+00> : vector<64xf32>
    %11 = vector.multi_reduction <add>, %10, %cst_13 [0] : vector<8x64xf32> to vector<64xf32>
    %12 = vector.shape_cast %11 : vector<64xf32> to vector<1x64xf32>
    %cst_14 = arith.constant 8.000000e+00 : f32
    %13 = vector.broadcast %cst_14 : f32 to vector<1x64xf32>
    %14 = arith.divf %12, %13 : vector<1x64xf32>
    %15 = vector.broadcast %14 : vector<1x64xf32> to vector<8x64xf32>
    %16 = arith.subf %10, %15 : vector<8x64xf32>
    %17 = arith.mulf %16, %16 : vector<8x64xf32>
    %cst_15 = arith.constant dense<0.000000e+00> : vector<64xf32>
    %18 = vector.multi_reduction <add>, %17, %cst_15 [0] : vector<8x64xf32> to vector<64xf32>
    %19 = vector.shape_cast %18 : vector<64xf32> to vector<1x64xf32>
    %cst_16 = arith.constant 8.000000e+00 : f32
    %20 = vector.broadcast %cst_16 : f32 to vector<1x64xf32>
    %21 = arith.divf %19, %20 : vector<1x64xf32>
    %cst_17 = arith.constant 9.99999974E-6 : f32
    %22 = vector.broadcast %cst_17 : f32 to vector<1x64xf32>
    %23 = arith.addf %21, %22 : vector<1x64xf32>
    %24 = math.rsqrt %23 : vector<1x64xf32>
    %c0_18 = arith.constant 0 : index
    %c0_19 = arith.constant 0 : index
    %25 = vector.load %arg7[%c0_18, %c0_19] : memref<2x64xf32, #tpu.memory_space<vmem>>, vector<1x64xf32>
    %c1 = arith.constant 1 : index
    %c0_20 = arith.constant 0 : index
    %26 = vector.load %arg7[%c1, %c0_20] : memref<2x64xf32, #tpu.memory_space<vmem>>, vector<1x64xf32>
    %27 = arith.mulf %25, %24 : vector<1x64xf32>
    %28 = vector.broadcast %27 : vector<1x64xf32> to vector<8x64xf32>
    %29 = arith.mulf %16, %28 : vector<8x64xf32>
    %30 = vector.broadcast %26 : vector<1x64xf32> to vector<8x64xf32>
    %31 = arith.addf %29, %30 : vector<8x64xf32>
    %cst_21 = arith.constant 0.000000e+00 : f32
    %32 = vector.broadcast %cst_21 : f32 to vector<8x64xf32>
    %33 = arith.maximumf %31, %32 : vector<8x64xf32>
    %c0_22 = arith.constant 0 : index
    %c0_23 = arith.constant 0 : index
    %34 = vector.load %arg8[%c0_22, %c0_23] : memref<64x48xf32, #tpu.memory_space<vmem>>, vector<64x48xf32>
    %cst_24 = arith.constant dense<0.000000e+00> : vector<8x48xf32>
    %35 = tpu.matmul %33, %34, %cst_24 {dimension_numbers = #tpu.dot_dimension_numbers<[1], [0], [0], [1], [0, 0, 1, 1], [], []>} : vector<8x64xf32>, vector<64x48xf32>, vector<8x48xf32> -> vector<8x48xf32>
    %cst_25 = arith.constant dense<0.000000e+00> : vector<48xf32>
    %36 = vector.multi_reduction <add>, %35, %cst_25 [0] : vector<8x48xf32> to vector<48xf32>
    %37 = vector.shape_cast %36 : vector<48xf32> to vector<1x48xf32>
    %cst_26 = arith.constant 8.000000e+00 : f32
    %38 = vector.broadcast %cst_26 : f32 to vector<1x48xf32>
    %39 = arith.divf %37, %38 : vector<1x48xf32>
    %40 = vector.broadcast %39 : vector<1x48xf32> to vector<8x48xf32>
    %41 = arith.subf %35, %40 : vector<8x48xf32>
    %42 = arith.mulf %41, %41 : vector<8x48xf32>
    %cst_27 = arith.constant dense<0.000000e+00> : vector<48xf32>
    %43 = vector.multi_reduction <add>, %42, %cst_27 [0] : vector<8x48xf32> to vector<48xf32>
    %44 = vector.shape_cast %43 : vector<48xf32> to vector<1x48xf32>
    %cst_28 = arith.constant 8.000000e+00 : f32
    %45 = vector.broadcast %cst_28 : f32 to vector<1x48xf32>
    %46 = arith.divf %44, %45 : vector<1x48xf32>
    %cst_29 = arith.constant 9.99999974E-6 : f32
    %47 = vector.broadcast %cst_29 : f32 to vector<1x48xf32>
    %48 = arith.addf %46, %47 : vector<1x48xf32>
    %49 = math.rsqrt %48 : vector<1x48xf32>
    %c0_30 = arith.constant 0 : index
    %c0_31 = arith.constant 0 : index
    %50 = vector.load %arg9[%c0_30, %c0_31] : memref<2x48xf32, #tpu.memory_space<vmem>>, vector<1x48xf32>
    %c1_32 = arith.constant 1 : index
    %c0_33 = arith.constant 0 : index
    %51 = vector.load %arg9[%c1_32, %c0_33] : memref<2x48xf32, #tpu.memory_space<vmem>>, vector<1x48xf32>
    %52 = arith.mulf %50, %49 : vector<1x48xf32>
    %53 = vector.broadcast %52 : vector<1x48xf32> to vector<8x48xf32>
    %54 = arith.mulf %41, %53 : vector<8x48xf32>
    %55 = vector.broadcast %51 : vector<1x48xf32> to vector<8x48xf32>
    %56 = arith.addf %54, %55 : vector<8x48xf32>
    %cst_34 = arith.constant 0.000000e+00 : f32
    %57 = vector.broadcast %cst_34 : f32 to vector<8x48xf32>
    %58 = arith.maximumf %56, %57 : vector<8x48xf32>
    %c0_35 = arith.constant 0 : index
    %c0_36 = arith.constant 0 : index
    %59 = vector.load %arg10[%c0_35, %c0_36] : memref<48x32xf32, #tpu.memory_space<vmem>>, vector<48x32xf32>
    %cst_37 = arith.constant dense<0.000000e+00> : vector<8x32xf32>
    %60 = tpu.matmul %58, %59, %cst_37 {dimension_numbers = #tpu.dot_dimension_numbers<[1], [0], [0], [1], [0, 0, 1, 1], [], []>} : vector<8x48xf32>, vector<48x32xf32>, vector<8x32xf32> -> vector<8x32xf32>
    %cst_38 = arith.constant dense<0.000000e+00> : vector<32xf32>
    %61 = vector.multi_reduction <add>, %60, %cst_38 [0] : vector<8x32xf32> to vector<32xf32>
    %62 = vector.shape_cast %61 : vector<32xf32> to vector<1x32xf32>
    %cst_39 = arith.constant 8.000000e+00 : f32
    %63 = vector.broadcast %cst_39 : f32 to vector<1x32xf32>
    %64 = arith.divf %62, %63 : vector<1x32xf32>
    %65 = vector.broadcast %64 : vector<1x32xf32> to vector<8x32xf32>
    %66 = arith.subf %60, %65 : vector<8x32xf32>
    %67 = arith.mulf %66, %66 : vector<8x32xf32>
    %cst_40 = arith.constant dense<0.000000e+00> : vector<32xf32>
    %68 = vector.multi_reduction <add>, %67, %cst_40 [0] : vector<8x32xf32> to vector<32xf32>
    %69 = vector.shape_cast %68 : vector<32xf32> to vector<1x32xf32>
    %cst_41 = arith.constant 8.000000e+00 : f32
    %70 = vector.broadcast %cst_41 : f32 to vector<1x32xf32>
    %71 = arith.divf %69, %70 : vector<1x32xf32>
    %cst_42 = arith.constant 9.99999974E-6 : f32
    %72 = vector.broadcast %cst_42 : f32 to vector<1x32xf32>
    %73 = arith.addf %71, %72 : vector<1x32xf32>
    %74 = math.rsqrt %73 : vector<1x32xf32>
    %c0_43 = arith.constant 0 : index
    %c0_44 = arith.constant 0 : index
    %75 = vector.load %arg11[%c0_43, %c0_44] : memref<2x32xf32, #tpu.memory_space<vmem>>, vector<1x32xf32>
    %c1_45 = arith.constant 1 : index
    %c0_46 = arith.constant 0 : index
    %76 = vector.load %arg11[%c1_45, %c0_46] : memref<2x32xf32, #tpu.memory_space<vmem>>, vector<1x32xf32>
    %77 = arith.mulf %75, %74 : vector<1x32xf32>
    %78 = vector.broadcast %77 : vector<1x32xf32> to vector<8x32xf32>
    %79 = arith.mulf %66, %78 : vector<8x32xf32>
    %80 = vector.broadcast %76 : vector<1x32xf32> to vector<8x32xf32>
    %81 = arith.addf %79, %80 : vector<8x32xf32>
    %cst_47 = arith.constant 0.000000e+00 : f32
    %82 = vector.broadcast %cst_47 : f32 to vector<8x32xf32>
    %83 = arith.maximumf %81, %82 : vector<8x32xf32>
    %c0_48 = arith.constant 0 : index
    %c0_49 = arith.constant 0 : index
    %84 = vector.load %arg12[%c0_48, %c0_49] : memref<32x32xf32, #tpu.memory_space<vmem>>, vector<32x32xf32>
    %cst_50 = arith.constant dense<0.000000e+00> : vector<8x32xf32>
    %85 = tpu.matmul %83, %84, %cst_50 {dimension_numbers = #tpu.dot_dimension_numbers<[1], [0], [0], [1], [0, 0, 1, 1], [], []>} : vector<8x32xf32>, vector<32x32xf32>, vector<8x32xf32> -> vector<8x32xf32>
    %c0_51 = arith.constant 0 : index
    %c0_52 = arith.constant 0 : index
    %86 = vector.load %arg13[%c0_51, %c0_52] : memref<1x32xf32, #tpu.memory_space<vmem>>, vector<1x32xf32>
    %87 = vector.broadcast %86 : vector<1x32xf32> to vector<8x32xf32>
    %88 = arith.addf %85, %87 : vector<8x32xf32>
    %89 = vector.extract_strided_slice %88 {offsets = [0, 0], sizes = [8, 16], strides = [1, 1]} : vector<8x32xf32> to vector<8x16xf32>
    %90 = vector.extract_strided_slice %88 {offsets = [0, 16], sizes = [8, 16], strides = [1, 1]} : vector<8x32xf32> to vector<8x16xf32>
    %cst_53 = arith.constant 0.000000e+00 : f32
    %91 = vector.broadcast %cst_53 : f32 to vector<8x16xf32>
    %92 = arith.maximumf %90, %91 : vector<8x16xf32>
    %93 = vector.broadcast %cst_53 : f32 to vector<8x16xf32>
    %94 = arith.subf %90, %93 : vector<8x16xf32>
    %95 = arith.cmpf one, %94, %94 : vector<8x16xf32>
    %96 = vector.broadcast %cst_53 : f32 to vector<8x16xf32>
    %97 = arith.addf %90, %96 : vector<8x16xf32>
    %98 = math.absf %94 : vector<8x16xf32>
    %cst_54 = arith.constant 0.000000e+00 : f32
    %99 = vector.broadcast %cst_54 : f32 to vector<8x16xf32>
    %100 = arith.subf %99, %98 : vector<8x16xf32>
    %101 = math.exp %100 : vector<8x16xf32>
    %102 = math.log1p %101 : vector<8x16xf32>
    %103 = arith.addf %92, %102 : vector<8x16xf32>
    %104 = arith.select %95, %97, %103 : vector<8x16xi1>, vector<8x16xf32>
    %c0_55 = arith.constant 0 : index
    %c0_56 = arith.constant 0 : index
    %105 = vector.load %arg25[%c0_55, %c0_56] : memref<8x16xf32, #tpu.memory_space<vmem>>, vector<8x16xf32>
    tpu.vector_store %arg25[%c0_55, %c0_56], %89 {strides = array<i32>} : memref<8x16xf32, #tpu.memory_space<vmem>>, vector<8x16xf32>,
    %c0_57 = arith.constant 0 : index
    %c0_58 = arith.constant 0 : index
    %106 = vector.load %arg26[%c0_57, %c0_58] : memref<8x16xf32, #tpu.memory_space<vmem>>, vector<8x16xf32>
    tpu.vector_store %arg26[%c0_57, %c0_58], %104 {strides = array<i32>} : memref<8x16xf32, #tpu.memory_space<vmem>>, vector<8x16xf32>,
    %cst_59 = arith.constant 5.000000e-01 : f32
    %107 = vector.broadcast %cst_59 : f32 to vector<8x16xf32>
    %108 = arith.mulf %104, %107 : vector<8x16xf32>
    %109 = math.exp %108 : vector<8x16xf32>
    %c0_60 = arith.constant 0 : index
    %c0_61 = arith.constant 0 : index
    %110 = vector.load %arg3[%c0_60, %c0_61] : memref<8x16xf32, #tpu.memory_space<vmem>>, vector<8x16xf32>
    %111 = arith.mulf %109, %110 : vector<8x16xf32>
    %112 = arith.addf %89, %111 : vector<8x16xf32>
    %c0_62 = arith.constant 0 : index
    %c0_63 = arith.constant 0 : index
    %113 = vector.load %arg14[%c0_62, %c0_63] : memref<16x32xf32, #tpu.memory_space<vmem>>, vector<16x32xf32>
    %cst_64 = arith.constant dense<0.000000e+00> : vector<8x32xf32>
    %114 = tpu.matmul %112, %113, %cst_64 {dimension_numbers = #tpu.dot_dimension_numbers<[1], [0], [0], [1], [0, 0, 1, 1], [], []>} : vector<8x16xf32>, vector<16x32xf32>, vector<8x32xf32> -> vector<8x32xf32>
    %c0_65 = arith.constant 0 : index
    %c0_66 = arith.constant 0 : index
    %115 = vector.load %arg15[%c0_65, %c0_66] : memref<16x32xf32, #tpu.memory_space<vmem>>, vector<16x32xf32>
    %cst_67 = arith.constant dense<0.000000e+00> : vector<8x32xf32>
    %116 = tpu.matmul %1, %115, %cst_67 {dimension_numbers = #tpu.dot_dimension_numbers<[1], [0], [0], [1], [0, 0, 1, 1], [], []>} : vector<8x16xf32>, vector<16x32xf32>, vector<8x32xf32> -> vector<8x32xf32>
    %117 = arith.addf %114, %116 : vector<8x32xf32>
    %c0_68 = arith.constant 0 : index
    %c0_69 = arith.constant 0 : index
    %118 = vector.load %arg16[%c0_68, %c0_69] : memref<8x32xf32, #tpu.memory_space<vmem>>, vector<8x32xf32>
    %cst_70 = arith.constant dense<0.000000e+00> : vector<8x32xf32>
    %119 = tpu.matmul %2, %118, %cst_70 {dimension_numbers = #tpu.dot_dimension_numbers<[1], [0], [0], [1], [0, 0, 1, 1], [], []>} : vector<8x8xf32>, vector<8x32xf32>, vector<8x32xf32> -> vector<8x32xf32>
    %120 = arith.addf %117, %119 : vector<8x32xf32>
    %cst_71 = arith.constant dense<0.000000e+00> : vector<32xf32>
    %121 = vector.multi_reduction <add>, %120, %cst_71 [0] : vector<8x32xf32> to vector<32xf32>
    %122 = vector.shape_cast %121 : vector<32xf32> to vector<1x32xf32>
    %cst_72 = arith.constant 8.000000e+00 : f32
    %123 = vector.broadcast %cst_72 : f32 to vector<1x32xf32>
    %124 = arith.divf %122, %123 : vector<1x32xf32>
    %125 = vector.broadcast %124 : vector<1x32xf32> to vector<8x32xf32>
    %126 = arith.subf %120, %125 : vector<8x32xf32>
    %127 = arith.mulf %126, %126 : vector<8x32xf32>
    %cst_73 = arith.constant dense<0.000000e+00> : vector<32xf32>
    %128 = vector.multi_reduction <add>, %127, %cst_73 [0] : vector<8x32xf32> to vector<32xf32>
    %129 = vector.shape_cast %128 : vector<32xf32> to vector<1x32xf32>
    %cst_74 = arith.constant 8.000000e+00 : f32
    %130 = vector.broadcast %cst_74 : f32 to vector<1x32xf32>
    %131 = arith.divf %129, %130 : vector<1x32xf32>
    %cst_75 = arith.constant 9.99999974E-6 : f32
    %132 = vector.broadcast %cst_75 : f32 to vector<1x32xf32>
    %133 = arith.addf %131, %132 : vector<1x32xf32>
    %134 = math.rsqrt %133 : vector<1x32xf32>
    %c0_76 = arith.constant 0 : index
    %c0_77 = arith.constant 0 : index
    %135 = vector.load %arg17[%c0_76, %c0_77] : memref<2x32xf32, #tpu.memory_space<vmem>>, vector<1x32xf32>
    %c1_78 = arith.constant 1 : index
    %c0_79 = arith.constant 0 : index
    %136 = vector.load %arg17[%c1_78, %c0_79] : memref<2x32xf32, #tpu.memory_space<vmem>>, vector<1x32xf32>
    %137 = arith.mulf %135, %134 : vector<1x32xf32>
    %138 = vector.broadcast %137 : vector<1x32xf32> to vector<8x32xf32>
    %139 = arith.mulf %126, %138 : vector<8x32xf32>
    %140 = vector.broadcast %136 : vector<1x32xf32> to vector<8x32xf32>
    %141 = arith.addf %139, %140 : vector<8x32xf32>
    %cst_80 = arith.constant 0.000000e+00 : f32
    %142 = vector.broadcast %cst_80 : f32 to vector<8x32xf32>
    %143 = arith.maximumf %141, %142 : vector<8x32xf32>
    %c0_81 = arith.constant 0 : index
    %c0_82 = arith.constant 0 : index
    %144 = vector.load %arg18[%c0_81, %c0_82] : memref<32x48xf32, #tpu.memory_space<vmem>>, vector<32x48xf32>
    %cst_83 = arith.constant dense<0.000000e+00> : vector<8x48xf32>
    %145 = tpu.matmul %143, %144, %cst_83 {dimension_numbers = #tpu.dot_dimension_numbers<[1], [0], [0], [1], [0, 0, 1, 1], [], []>} : vector<8x32xf32>, vector<32x48xf32>, vector<8x48xf32> -> vector<8x48xf32>
    %cst_84 = arith.constant dense<0.000000e+00> : vector<48xf32>
    %146 = vector.multi_reduction <add>, %145, %cst_84 [0] : vector<8x48xf32> to vector<48xf32>
    %147 = vector.shape_cast %146 : vector<48xf32> to vector<1x48xf32>
    %cst_85 = arith.constant 8.000000e+00 : f32
    %148 = vector.broadcast %cst_85 : f32 to vector<1x48xf32>
    %149 = arith.divf %147, %148 : vector<1x48xf32>
    %150 = vector.broadcast %149 : vector<1x48xf32> to vector<8x48xf32>
    %151 = arith.subf %145, %150 : vector<8x48xf32>
    %152 = arith.mulf %151, %151 : vector<8x48xf32>
    %cst_86 = arith.constant dense<0.000000e+00> : vector<48xf32>
    %153 = vector.multi_reduction <add>, %152, %cst_86 [0] : vector<8x48xf32> to vector<48xf32>
    %154 = vector.shape_cast %153 : vector<48xf32> to vector<1x48xf32>
    %cst_87 = arith.constant 8.000000e+00 : f32
    %155 = vector.broadcast %cst_87 : f32 to vector<1x48xf32>
    %156 = arith.divf %154, %155 : vector<1x48xf32>
    %cst_88 = arith.constant 9.99999974E-6 : f32
    %157 = vector.broadcast %cst_88 : f32 to vector<1x48xf32>
    %158 = arith.addf %156, %157 : vector<1x48xf32>
    %159 = math.rsqrt %158 : vector<1x48xf32>
    %c0_89 = arith.constant 0 : index
    %c0_90 = arith.constant 0 : index
    %160 = vector.load %arg19[%c0_89, %c0_90] : memref<2x48xf32, #tpu.memory_space<vmem>>, vector<1x48xf32>
    %c1_91 = arith.constant 1 : index
    %c0_92 = arith.constant 0 : index
    %161 = vector.load %arg19[%c1_91, %c0_92] : memref<2x48xf32, #tpu.memory_space<vmem>>, vector<1x48xf32>
    %162 = arith.mulf %160, %159 : vector<1x48xf32>
    %163 = vector.broadcast %162 : vector<1x48xf32> to vector<8x48xf32>
    %164 = arith.mulf %151, %163 : vector<8x48xf32>
    %165 = vector.broadcast %161 : vector<1x48xf32> to vector<8x48xf32>
    %166 = arith.addf %164, %165 : vector<8x48xf32>
    %cst_93 = arith.constant 0.000000e+00 : f32
    %167 = vector.broadcast %cst_93 : f32 to vector<8x48xf32>
    %168 = arith.maximumf %166, %167 : vector<8x48xf32>
    %c0_94 = arith.constant 0 : index
    %c0_95 = arith.constant 0 : index
    %169 = vector.load %arg20[%c0_94, %c0_95] : memref<48x64xf32, #tpu.memory_space<vmem>>, vector<48x64xf32>
    %cst_96 = arith.constant dense<0.000000e+00> : vector<8x64xf32>
    %170 = tpu.matmul %168, %169, %cst_96 {dimension_numbers = #tpu.dot_dimension_numbers<[1], [0], [0], [1], [0, 0, 1, 1], [], []>} : vector<8x48xf32>, vector<48x64xf32>, vector<8x64xf32> -> vector<8x64xf32>
    %cst_97 = arith.constant dense<0.000000e+00> : vector<64xf32>
    %171 = vector.multi_reduction <add>, %170, %cst_97 [0] : vector<8x64xf32> to vector<64xf32>
    %172 = vector.shape_cast %171 : vector<64xf32> to vector<1x64xf32>
    %cst_98 = arith.constant 8.000000e+00 : f32
    %173 = vector.broadcast %cst_98 : f32 to vector<1x64xf32>
    %174 = arith.divf %172, %173 : vector<1x64xf32>
    %175 = vector.broadcast %174 : vector<1x64xf32> to vector<8x64xf32>
    %176 = arith.subf %170, %175 : vector<8x64xf32>
    %177 = arith.mulf %176, %176 : vector<8x64xf32>
    %cst_99 = arith.constant dense<0.000000e+00> : vector<64xf32>
    %178 = vector.multi_reduction <add>, %177, %cst_99 [0] : vector<8x64xf32> to vector<64xf32>
    %179 = vector.shape_cast %178 : vector<64xf32> to vector<1x64xf32>
    %cst_100 = arith.constant 8.000000e+00 : f32
    %180 = vector.broadcast %cst_100 : f32 to vector<1x64xf32>
    %181 = arith.divf %179, %180 : vector<1x64xf32>
    %cst_101 = arith.constant 9.99999974E-6 : f32
    %182 = vector.broadcast %cst_101 : f32 to vector<1x64xf32>
    %183 = arith.addf %181, %182 : vector<1x64xf32>
    %184 = math.rsqrt %183 : vector<1x64xf32>
    %c0_102 = arith.constant 0 : index
    %c0_103 = arith.constant 0 : index
    %185 = vector.load %arg21[%c0_102, %c0_103] : memref<2x64xf32, #tpu.memory_space<vmem>>, vector<1x64xf32>
    %c1_104 = arith.constant 1 : index
    %c0_105 = arith.constant 0 : index
    %186 = vector.load %arg21[%c1_104, %c0_105] : memref<2x64xf32, #tpu.memory_space<vmem>>, vector<1x64xf32>
    %187 = arith.mulf %185, %184 : vector<1x64xf32>
    %188 = vector.broadcast %187 : vector<1x64xf32> to vector<8x64xf32>
    %189 = arith.mulf %176, %188 : vector<8x64xf32>
    %190 = vector.broadcast %186 : vector<1x64xf32> to vector<8x64xf32>
    %191 = arith.addf %189, %190 : vector<8x64xf32>
    %cst_106 = arith.constant 0.000000e+00 : f32
    %192 = vector.broadcast %cst_106 : f32 to vector<8x64xf32>
    %193 = arith.maximumf %191, %192 : vector<8x64xf32>
    %c0_107 = arith.constant 0 : index
    %c0_108 = arith.constant 0 : index
    %194 = vector.load %arg22[%c0_107, %c0_108] : memref<64x40xf32, #tpu.memory_space<vmem>>, vector<64x40xf32>
    %cst_109 = arith.constant dense<0.000000e+00> : vector<8x40xf32>
    %195 = tpu.matmul %193, %194, %cst_109 {dimension_numbers = #tpu.dot_dimension_numbers<[1], [0], [0], [1], [0, 0, 1, 1], [], []>} : vector<8x64xf32>, vector<64x40xf32>, vector<8x40xf32> -> vector<8x40xf32>
    %c0_110 = arith.constant 0 : index
    %c0_111 = arith.constant 0 : index
    %196 = vector.load %arg23[%c0_110, %c0_111] : memref<1x40xf32, #tpu.memory_space<vmem>>, vector<1x40xf32>
    %197 = vector.broadcast %196 : vector<1x40xf32> to vector<8x40xf32>
    %198 = arith.addf %195, %197 : vector<8x40xf32>
    %199 = arith.negf %198 : vector<8x40xf32>
    %200 = math.exp %199 : vector<8x40xf32>
    %cst_112 = arith.constant 1.000000e+00 : f32
    %201 = vector.broadcast %cst_112 : f32 to vector<8x40xf32>
    %202 = arith.addf %201, %200 : vector<8x40xf32>
    %203 = arith.divf %201, %202 : vector<8x40xf32>
    %c0_113 = arith.constant 0 : index
    %c0_114 = arith.constant 0 : index
    %204 = vector.load %arg24[%c0_113, %c0_114] : memref<8x40xf32, #tpu.memory_space<vmem>>, vector<8x40xf32>
    tpu.vector_store %arg24[%c0_113, %c0_114], %203 {strides = array<i32>} : memref<8x40xf32, #tpu.memory_space<vmem>>, vector<8x40xf32>,
    return
  }
}

</mosaic_0001>

<llo_original>
// kernel: vae_forward.1
$region0: #{vae_forward.1}
  #allocation0 [shape = 'u32[]', space=smem, size = 0x4, offset = 0x4, fixed_abs, tag = 'smem constant byte address 0x4 - core index']
  #allocation1 [shape = 'u32[72,128]{1,0:T(1,128)}', space=vmem, size = 0x9000, scoped, tag = 'internal scratch']
  %s0 = inlined_call_operand.vmem [shape: f32[8,40], index: 0, kind: input, shape index: {}]
  %s1 = inlined_call_operand.vmem [shape: f32[8,16], index: 1, kind: input, shape index: {}]
  %s2 = inlined_call_operand.vmem [shape: f32[8,8], index: 2, kind: input, shape index: {}]
  %s3 = inlined_call_operand.hbm [shape: f32[8,16], index: 3, kind: input, shape index: {}]
  %s4 = inlined_call_operand.vmem [shape: f32[40,64], index: 4, kind: input, shape index: {}]
  %s5 = inlined_call_operand.vmem [shape: f32[16,64], index: 5, kind: input, shape index: {}]
  %s6 = inlined_call_operand.hbm [shape: f32[8,64], index: 6, kind: input, shape index: {}]
  %s7 = inlined_call_operand.hbm [shape: f32[2,64], index: 7, kind: input, shape index: {}]
  %s8 = inlined_call_operand.vmem [shape: f32[64,48], index: 8, kind: input, shape index: {}]
  %s9 = inlined_call_operand.hbm [shape: f32[2,48], index: 9, kind: input, shape index: {}]
  %s10 = inlined_call_operand.vmem [shape: f32[48,32], index: 10, kind: input, shape index: {}]
  %s11 = inlined_call_operand.hbm [shape: f32[2,32], index: 11, kind: input, shape index: {}]
  %s12 = inlined_call_operand.vmem [shape: f32[32,32], index: 12, kind: input, shape index: {}]
  %s13 = inlined_call_operand.hbm [shape: f32[1,32], index: 13, kind: input, shape index: {}]
  %s14 = inlined_call_operand.vmem [shape: f32[16,32], index: 14, kind: input, shape index: {}]
  %s15 = inlined_call_operand.vmem [shape: f32[16,32], index: 15, kind: input, shape index: {}]
  %s16 = inlined_call_operand.hbm [shape: f32[8,32], index: 16, kind: input, shape index: {}]
  %s17 = inlined_call_operand.hbm [shape: f32[2,32], index: 17, kind: input, shape index: {}]
  %s18 = inlined_call_operand.vmem [shape: f32[32,48], index: 18, kind: input, shape index: {}]
  %s19 = inlined_call_operand.hbm [shape: f32[2,48], index: 19, kind: input, shape index: {}]
  %s20 = inlined_call_operand.vmem [shape: f32[48,64], index: 20, kind: input, shape index: {}]
  %s21 = inlined_call_operand.hbm [shape: f32[2,64], index: 21, kind: input, shape index: {}]
  %s22 = inlined_call_operand.vmem [shape: f32[64,40], index: 22, kind: input, shape index: {}]
  %s23 = inlined_call_operand.vmem [shape: f32[1,40], index: 23, kind: input, shape index: {}]
  %s24 = inlined_call_operand.hbm [shape: f32[8,40], index: 24, kind: output, shape index: {0}]
  %s25 = inlined_call_operand.hbm [shape: f32[8,16], index: 25, kind: output, shape index: {1}]
  %s26 = inlined_call_operand.hbm [shape: f32[8,16], index: 26, kind: output, shape index: {2}]
  %27 = xla_tuple %s24, %s25, %s26
  %s28 = sld [smem:[#allocation0]]
  $region162: #{vae_forward.1} parent=0
    _
  %s30 = ssub.s32 1, %s28
  %s31 = scalar_select 0, %s30, %s28
  $region1: #{vae_forward.1} parent=0
    #allocation2 [shape = 'u8[4096]{0}', space=vmem, size = 0x1000, scoped, tag = 'input window, operand 3, single buffered']
    #allocation3 [shape = 's32[1]{0}', space=sflag, size = 0x4, scoped, tag = 'scoped memory for vae_forward.1']
    #allocation4 [shape = 's32[1]{0}', space=sflag, size = 0x4, scoped, tag = 'scoped memory for vae_forward.1']
    #allocation5 [shape = 'u8[4096]{0}', space=vmem, size = 0x1000, scoped, tag = 'input window, operand 6, single buffered']
    #allocation6 [shape = 's32[1]{0}', space=sflag, size = 0x4, scoped, tag = 'scoped memory for vae_forward.1']
    #allocation7 [shape = 'u8[1024]{0}', space=vmem, size = 0x400, scoped, tag = 'input window, operand 7, single buffered']
    #allocation8 [shape = 'u8[1024]{0}', space=vmem, size = 0x400, scoped, tag = 'input window, operand 9, single buffered']
    #allocation9 [shape = 's32[1]{0}', space=sflag, size = 0x4, scoped, tag = 'scoped memory for vae_forward.1']
    #allocation10 [shape = 'u8[1024]{0}', space=vmem, size = 0x400, scoped, tag = 'input window, operand 11, single buffered']
    #allocation11 [shape = 'u8[512]{0}', space=vmem, size = 0x400, scoped, tag = 'input window, operand 13, single buffered']
    #allocation12 [shape = 's32[1]{0}', space=sflag, size = 0x4, scoped, tag = 'scoped memory for vae_forward.1']
    #allocation13 [shape = 'u8[4096]{0}', space=vmem, size = 0x1000, scoped, tag = 'input window, operand 16, single buffered']
    #allocation14 [shape = 'u8[1024]{0}', space=vmem, size = 0x400, scoped, tag = 'input window, operand 17, single buffered']
    #allocation15 [shape = 's32[1]{0}', space=sflag, size = 0x4, scoped, tag = 'scoped memory for vae_forward.1']
    #allocation16 [shape = 'u8[1024]{0}', space=vmem, size = 0x400, scoped, tag = 'input window, operand 19, single buffered']
    #allocation17 [shape = 'u8[1024]{0}', space=vmem, size = 0x400, scoped, tag = 'input window, operand 21, single buffered']
    #allocation18 [shape = 's32[1]{0}', space=sflag, size = 0x4, scoped, tag = 'scoped memory for vae_forward.1']
    #allocation19 [shape = 'u8[4096]{0}', space=vmem, size = 0x1000, scoped, tag = 'output window, operand 0, single buffered']
    #allocation20 [shape = 'u8[4096]{0}', space=vmem, size = 0x1000, scoped, tag = 'output window, operand 1, single buffered']
    #allocation21 [shape = 's32[1]{0}', space=sflag, size = 0x4, scoped, tag = 'scoped memory for vae_forward.1']
    #allocation22 [shape = 'u8[4096]{0}', space=vmem, size = 0x1000, scoped, tag = 'output window, operand 2, single buffered']
    %32 = vsyncpa [#allocation3], 0
    %33 = vsyncpa [#allocation6], 0
    %34 = vsyncpa [#allocation9], 0
    %35 = vsyncpa [#allocation12], 0
    %36 = vsyncpa [#allocation15], 0
    %37 = vsyncpa [#allocation18], 0
    %38 = vsyncpa [#allocation4], 0
    %39 = vsyncpa [#allocation21], 0
    // Predicated region
    $region2: #{vae_forward.1} parent=1 // pred_check
      _
    $region3: #{vae_forward.1} parent=1 // pred_check_branch
      %41 = sbr.rel (0) target = $region5
    $region4: #{vae_forward.1} parent=1 // pred_region
      _
    $region5: #{vae_forward.1} parent=1 // pred_fallthru
      _
    // Predicated region
    $region6: #{vae_forward.1} parent=1 // pred_check
      _
    $region7: #{vae_forward.1} parent=1 // pred_check_branch
      %43 = sbr.rel (0) target = $region9
    $region8: #{vae_forward.1} parent=1 // pred_region
      _
    $region9: #{vae_forward.1} parent=1 // pred_fallthru
      _
    // Predicated region
    $region10: #{vae_forward.1} parent=1 // pred_check
      _
    $region11: #{vae_forward.1} parent=1 // pred_check_branch
      %45 = sbr.rel (0) target = $region13
    $region12: #{vae_forward.1} parent=1 // pred_region
      _
    $region13: #{vae_forward.1} parent=1 // pred_fallthru
      _
    // Predicated region
    $region14: #{vae_forward.1} parent=1 // pred_check
      _
    $region15: #{vae_forward.1} parent=1 // pred_check_branch
      %47 = sbr.rel (0) target = $region17
    $region16: #{vae_forward.1} parent=1 // pred_region
      %49 = vsyncadd [#allocation3], 0
      %s51 = sshll.u32 %s3, 4
      %s52 = int_to_ptr.hbm [resolvable:$true] %s51
      %s53 = sshll.u32 [#allocation2], 4
      %s54 = int_to_ptr.vmem [resolvable:$true] %s53
      %56 = dma.hbm_to_vmem [thread:$0]  %s52, 128, %s54, [#allocation3]
    $region17: #{vae_forward.1} parent=1 // pred_fallthru
      _
    // Predicated region
    $region18: #{vae_forward.1} parent=1 // pred_check
      _
    $region19: #{vae_forward.1} parent=1 // pred_check_branch
      %58 = sbr.rel (0) target = $region21
    $region20: #{vae_forward.1} parent=1 // pred_region
      _
    $region21: #{vae_forward.1} parent=1 // pred_fallthru
      _
    // Predicated region
    $region22: #{vae_forward.1} parent=1 // pred_check
      _
    $region23: #{vae_forward.1} parent=1 // pred_check_branch
      %60 = sbr.rel (0) target = $region25
    $region24: #{vae_forward.1} parent=1 // pred_region
      _
    $region25: #{vae_forward.1} parent=1 // pred_fallthru
      _
    // Predicated region
    $region26: #{vae_forward.1} parent=1 // pred_check
      _
    $region27: #{vae_forward.1} parent=1 // pred_check_branch
      %62 = sbr.rel (0) target = $region29
    $region28: #{vae_forward.1} parent=1 // pred_region
      %64 = vsyncadd [#allocation6], 0
      %s66 = sshll.u32 %s6, 4
      %s67 = int_to_ptr.hbm [resolvable:$true] %s66
      %s68 = sshll.u32 [#allocation5], 4
      %s69 = int_to_ptr.vmem [resolvable:$true] %s68
      %71 = dma.hbm_to_vmem [thread:$0]  %s67, 128, %s69, [#allocation6]
    $region29: #{vae_forward.1} parent=1 // pred_fallthru
      _
    // Predicated region
    $region30: #{vae_forward.1} parent=1 // pred_check
      _
    $region31: #{vae_forward.1} parent=1 // pred_check_branch
      %73 = sbr.rel (0) target = $region33
    $region32: #{vae_forward.1} parent=1 // pred_region
      %75 = vsyncadd [#allocation6], 0
      %s77 = sshll.u32 %s7, 4
      %s78 = int_to_ptr.hbm [resolvable:$true] %s77
      %s79 = sshll.u32 [#allocation7], 4
      %s80 = int_to_ptr.vmem [resolvable:$true] %s79
      %82 = dma.hbm_to_vmem [thread:$0]  %s78, 32, %s80, [#allocation6]
    $region33: #{vae_forward.1} parent=1 // pred_fallthru
      _
    // Predicated region
    $region34: #{vae_forward.1} parent=1 // pred_check
      _
    $region35: #{vae_forward.1} parent=1 // pred_check_branch
      %84 = sbr.rel (0) target = $region37
    $region36: #{vae_forward.1} parent=1 // pred_region
      _
    $region37: #{vae_forward.1} parent=1 // pred_fallthru
      _
    // Predicated region
    $region38: #{vae_forward.1} parent=1 // pred_check
      _
    $region39: #{vae_forward.1} parent=1 // pred_check_branch
      %86 = sbr.rel (0) target = $region41
    $region40: #{vae_forward.1} parent=1 // pred_region
      %88 = vsyncadd [#allocation9], 0
      %s90 = sshll.u32 %s9, 4
      %s91 = int_to_ptr.hbm [resolvable:$true] %s90
      %s92 = sshll.u32 [#allocation8], 4
      %s93 = int_to_ptr.vmem [resolvable:$true] %s92
      %95 = dma.hbm_to_vmem [thread:$0]  %s91, 32, %s93, [#allocation9]
    $region41: #{vae_forward.1} parent=1 // pred_fallthru
      _
    // Predicated region
    $region42: #{vae_forward.1} parent=1 // pred_check
      _
    $region43: #{vae_forward.1} parent=1 // pred_check_branch
      %97 = sbr.rel (0) target = $region45
    $region44: #{vae_forward.1} parent=1 // pred_region
      _
    $region45: #{vae_forward.1} parent=1 // pred_fallthru
      _
    // Predicated region
    $region46: #{vae_forward.1} parent=1 // pred_check
      _
    $region47: #{vae_forward.1} parent=1 // pred_check_branch
      %99 = sbr.rel (0) target = $region49
    $region48: #{vae_forward.1} parent=1 // pred_region
      %101 = vsyncadd [#allocation9], 0
      %s103 = sshll.u32 %s11, 4
      %s104 = int_to_ptr.hbm [resolvable:$true] %s103
      %s105 = sshll.u32 [#allocation10], 4
      %s106 = int_to_ptr.vmem [resolvable:$true] %s105
      %108 = dma.hbm_to_vmem [thread:$0]  %s104, 32, %s106, [#allocation9]
    $region49: #{vae_forward.1} parent=1 // pred_fallthru
      _
    // Predicated region
    $region50: #{vae_forward.1} parent=1 // pred_check
      _
    $region51: #{vae_forward.1} parent=1 // pred_check_branch
      %110 = sbr.rel (0) target = $region53
    $region52: #{vae_forward.1} parent=1 // pred_region
      _
    $region53: #{vae_forward.1} parent=1 // pred_fallthru
      _
    // Predicated region
    $region54: #{vae_forward.1} parent=1 // pred_check
      _
    $region55: #{vae_forward.1} parent=1 // pred_check_branch
      %112 = sbr.rel (0) target = $region57
    $region56: #{vae_forward.1} parent=1 // pred_region
      %114 = vsyncadd [#allocation12], 0
      %s116 = sshll.u32 %s13, 4
      %s117 = int_to_ptr.hbm [resolvable:$true] %s116
      %s118 = sshll.u32 [#allocation11], 4
      %s119 = int_to_ptr.vmem [resolvable:$true] %s118
      %121 = dma.hbm_to_vmem [thread:$0]  %s117, 16, %s119, [#allocation12]
    $region57: #{vae_forward.1} parent=1 // pred_fallthru
      _
    // Predicated region
    $region58: #{vae_forward.1} parent=1 // pred_check
      _
    $region59: #{vae_forward.1} parent=1 // pred_check_branch
      %123 = sbr.rel (0) target = $region61
    $region60: #{vae_forward.1} parent=1 // pred_region
      _
    $region61: #{vae_forward.1} parent=1 // pred_fallthru
      _
    // Predicated region
    $region62: #{vae_forward.1} parent=1 // pred_check
      _
    $region63: #{vae_forward.1} parent=1 // pred_check_branch
      %125 = sbr.rel (0) target = $region65
    $region64: #{vae_forward.1} parent=1 // pred_region
      _
    $region65: #{vae_forward.1} parent=1 // pred_fallthru
      _
    // Predicated region
    $region66: #{vae_forward.1} parent=1 // pred_check
      _
    $region67: #{vae_forward.1} parent=1 // pred_check_branch
      %127 = sbr.rel (0) target = $region69
    $region68: #{vae_forward.1} parent=1 // pred_region
      %129 = vsyncadd [#allocation12], 0
      %s131 = sshll.u32 %s16, 4
      %s132 = int_to_ptr.hbm [resolvable:$true] %s131
      %s133 = sshll.u32 [#allocation13], 4
      %s134 = int_to_ptr.vmem [resolvable:$true] %s133
      %136 = dma.hbm_to_vmem [thread:$0]  %s132, 128, %s134, [#allocation12]
    $region69: #{vae_forward.1} parent=1 // pred_fallthru
      _
    // Predicated region
    $region70: #{vae_forward.1} parent=1 // pred_check
      _
    $region71: #{vae_forward.1} parent=1 // pred_check_branch
      %138 = sbr.rel (0) target = $region73
    $region72: #{vae_forward.1} parent=1 // pred_region
      %140 = vsyncadd [#allocation15], 0
      %s142 = sshll.u32 %s17, 4
      %s143 = int_to_ptr.hbm [resolvable:$true] %s142
      %s144 = sshll.u32 [#allocation14], 4
      %s145 = int_to_ptr.vmem [resolvable:$true] %s144
      %147 = dma.hbm_to_vmem [thread:$0]  %s143, 32, %s145, [#allocation15]
    $region73: #{vae_forward.1} parent=1 // pred_fallthru
      _
    // Predicated region
    $region74: #{vae_forward.1} parent=1 // pred_check
      _
    $region75: #{vae_forward.1} parent=1 // pred_check_branch
      %149 = sbr.rel (0) target = $region77
    $region76: #{vae_forward.1} parent=1 // pred_region
      _
    $region77: #{vae_forward.1} parent=1 // pred_fallthru
      _
    // Predicated region
    $region78: #{vae_forward.1} parent=1 // pred_check
      _
    $region79: #{vae_forward.1} parent=1 // pred_check_branch
      %151 = sbr.rel (0) target = $region81
    $region80: #{vae_forward.1} parent=1 // pred_region
      %153 = vsyncadd [#allocation15], 0
      %s155 = sshll.u32 %s19, 4
      %s156 = int_to_ptr.hbm [resolvable:$true] %s155
      %s157 = sshll.u32 [#allocation16], 4
      %s158 = int_to_ptr.vmem [resolvable:$true] %s157
      %160 = dma.hbm_to_vmem [thread:$0]  %s156, 32, %s158, [#allocation15]
    $region81: #{vae_forward.1} parent=1 // pred_fallthru
      _
    // Predicated region
    $region82: #{vae_forward.1} parent=1 // pred_check
      _
    $region83: #{vae_forward.1} parent=1 // pred_check_branch
      %162 = sbr.rel (0) target = $region85
    $region84: #{vae_forward.1} parent=1 // pred_region
      _
    $region85: #{vae_forward.1} parent=1 // pred_fallthru
      _
    // Predicated region
    $region86: #{vae_forward.1} parent=1 // pred_check
      _
    $region87: #{vae_forward.1} parent=1 // pred_check_branch
      %164 = sbr.rel (0) target = $region89
    $region88: #{vae_forward.1} parent=1 // pred_region
      %166 = vsyncadd [#allocation18], 0
      %s168 = sshll.u32 %s21, 4
      %s169 = int_to_ptr.hbm [resolvable:$true] %s168
      %s170 = sshll.u32 [#allocation17], 4
      %s171 = int_to_ptr.vmem [resolvable:$true] %s170
      %173 = dma.hbm_to_vmem [thread:$0]  %s169, 32, %s171, [#allocation18]
    $region89: #{vae_forward.1} parent=1 // pred_fallthru
      _
    // Predicated region
    $region90: #{vae_forward.1} parent=1 // pred_check
      _
    $region91: #{vae_forward.1} parent=1 // pred_check_branch
      %175 = sbr.rel (0) target = $region93
    $region92: #{vae_forward.1} parent=1 // pred_region
      _
    $region93: #{vae_forward.1} parent=1 // pred_fallthru
      _
    // Predicated region
    $region94: #{vae_forward.1} parent=1 // pred_check
      _
    $region95: #{vae_forward.1} parent=1 // pred_check_branch
      %177 = sbr.rel (0) target = $region97
    $region96: #{vae_forward.1} parent=1 // pred_region
      _
    $region97: #{vae_forward.1} parent=1 // pred_fallthru
      _
    // Predicated region
    $region98: #{vae_forward.1} parent=1 // pred_check
      _
    $region99: #{vae_forward.1} parent=1 // pred_check_branch
      %179 = sbr.rel (0) target = $region101
    $region100: #{vae_forward.1} parent=1 // pred_region
      %181 = dma.done [#allocation3], 128
    $region101: #{vae_forward.1} parent=1 // pred_fallthru
      _
    // Predicated region
    $region102: #{vae_forward.1} parent=1 // pred_check
      _
    $region103: #{vae_forward.1} parent=1 // pred_check_branch
      %183 = sbr.rel (0) target = $region105
    $region104: #{vae_forward.1} parent=1 // pred_region
      %185 = dma.done [#allocation6], 128
    $region105: #{vae_forward.1} parent=1 // pred_fallthru
      _
    // Predicated region
    $region106: #{vae_forward.1} parent=1 // pred_check
      _
    $region107: #{vae_forward.1} parent=1 // pred_check_branch
      %187 = sbr.rel (0) target = $region109
    $region108: #{vae_forward.1} parent=1 // pred_region
      %189 = dma.done [#allocation6], 32
    $region109: #{vae_forward.1} parent=1 // pred_fallthru
      _
    // Predicated region
    $region110: #{vae_forward.1} parent=1 // pred_check
      _
    $region111: #{vae_forward.1} parent=1 // pred_check_branch
      %191 = sbr.rel (0) target = $region113
    $region112: #{vae_forward.1} parent=1 // pred_region
      %193 = dma.done [#allocation9], 32
    $region113: #{vae_forward.1} parent=1 // pred_fallthru
      _
    // Predicated region
    $region114: #{vae_forward.1} parent=1 // pred_check
      _
    $region115: #{vae_forward.1} parent=1 // pred_check_branch
      %195 = sbr.rel (0) target = $region117
    $region116: #{vae_forward.1} parent=1 // pred_region
      %197 = dma.done [#allocation9], 32
    $region117: #{vae_forward.1} parent=1 // pred_fallthru
      _
    // Predicated region
    $region118: #{vae_forward.1} parent=1 // pred_check
      _
    $region119: #{vae_forward.1} parent=1 // pred_check_branch
      %199 = sbr.rel (0) target = $region121
    $region120: #{vae_forward.1} parent=1 // pred_region
      %201 = dma.done [#allocation12], 16
    $region121: #{vae_forward.1} parent=1 // pred_fallthru
      _
    // Predicated region
    $region122: #{vae_forward.1} parent=1 // pred_check
      _
    $region123: #{vae_forward.1} parent=1 // pred_check_branch
      %203 = sbr.rel (0) target = $region125
    $region124: #{vae_forward.1} parent=1 // pred_region
      %205 = dma.done [#allocation12], 128
    $region125: #{vae_forward.1} parent=1 // pred_fallthru
      _
    // Predicated region
    $region126: #{vae_forward.1} parent=1 // pred_check
      _
    $region127: #{vae_forward.1} parent=1 // pred_check_branch
      %207 = sbr.rel (0) target = $region129
    $region128: #{vae_forward.1} parent=1 // pred_region
      %209 = dma.done [#allocation15], 32
    $region129: #{vae_forward.1} parent=1 // pred_fallthru
      _
    // Predicated region
    $region130: #{vae_forward.1} parent=1 // pred_check
      _
    $region131: #{vae_forward.1} parent=1 // pred_check_branch
      %211 = sbr.rel (0) target = $region133
    $region132: #{vae_forward.1} parent=1 // pred_region
      %213 = dma.done [#allocation15], 32
    $region133: #{vae_forward.1} parent=1 // pred_fallthru
      _
    // Predicated region
    $region134: #{vae_forward.1} parent=1 // pred_check
      _
    $region135: #{vae_forward.1} parent=1 // pred_check_branch
      %215 = sbr.rel (0) target = $region137
    $region136: #{vae_forward.1} parent=1 // pred_region
      %217 = dma.done [#allocation18], 32
    $region137: #{vae_forward.1} parent=1 // pred_fallthru
      _
    %v218 = vld [vmem:[%s0] sm:$0xff]
    %v219 = vld [vmem:[%s1] sm:$0xff]
    %v220 = vld [vmem:[%s2] sm:$0xff]
    %v221 = vld [vmem:[%s4] sm:$0xff]
    %v222 = vld [vmem:[%s4 + $0x8] sm:$0xff]
    %v223 = vld [vmem:[%s4 + $0x10] sm:$0xff]
    %v224 = vld [vmem:[%s4 + $0x18] sm:$0xff]
    %v225 = vld [vmem:[%s4 + $0x20] sm:$0xff]
    %v226 = vld [vmem:[%s5] sm:$0xff]
    %v227 = vld [vmem:[%s5 + $0x8] sm:$0xff]
    %vm228 = vcmask 130048
    %v230 = vsel %vm228, %v219, 0
    %232 = vmatpush.msra.mxu0 0.0
    %233 = vmatpush.msra.mxu0 0.0
    %234 = vmatpush.msra.mxu0 0.0
    %235 = vmatpush.msra.mxu0 0.0
    %236 = vmatpush.msra.mxu0 0.0
    %237 = vmatpush.msra.mxu0 0.0
    %238 = vmatpush.msra.mxu0 0.0
    %239 = vmatpush.msra.mxu0 0.0
    %240 = vmatpush.msra.mxu0 0.0
    %241 = vmatpush.msra.mxu0 0.0
    %242 = vmatpush.msra.mxu0 0.0
    %243 = vmatpush.msra.mxu0 0.0
    %244 = vmatpush.msra.mxu0 0.0
    %245 = vmatpush.msra.mxu0 0.0
    %246 = vmatpush.msra.mxu0 %v227
    %247 = vmatpush.msra.mxu0 %v226
    %248 = vmatmul.f32.gmra.mxu0 %v230
    %v249 = vpop.f32.mrf.mxu0
    %v250 = vadd.f32 0.0, %v249
    %251 = vdwg.mxu0
    %vm252 = vcmask 326656
    %v254 = vsel %vm252, %v218, 0
    %256 = vmatpush.msra.mxu0 0.0
    %257 = vmatpush.msra.mxu0 0.0
    %258 = vmatpush.msra.mxu0 0.0
    %259 = vmatpush.msra.mxu0 0.0
    %260 = vmatpush.msra.mxu0 0.0
    %261 = vmatpush.msra.mxu0 0.0
    %262 = vmatpush.msra.mxu0 0.0
    %263 = vmatpush.msra.mxu0 0.0
    %264 = vmatpush.msra.mxu0 0.0
    %265 = vmatpush.msra.mxu0 0.0
    %266 = vmatpush.msra.mxu0 0.0
    %267 = vmatpush.msra.mxu0 %v225
    %268 = vmatpush.msra.mxu0 %v224
    %269 = vmatpush.msra.mxu0 %v223
    %270 = vmatpush.msra.mxu0 %v222
    %271 = vmatpush.msra.mxu0 %v221
    %272 = vmatmul.f32.gmra.mxu0 %v254
    %v273 = vpop.f32.mrf.mxu0
    %v274 = vadd.f32 %v250, %v273
    %275 = vdwg.mxu0
    %v276 = vld [vmem:[#allocation5] sm:$0xff]
    %vm277 = vcmask 64512
    %v279 = vsel %vm277, %v220, 0
    %281 = vmatpush.msra.mxu0 0.0
    %282 = vmatpush.msra.mxu0 0.0
    %283 = vmatpush.msra.mxu0 0.0
    %284 = vmatpush.msra.mxu0 0.0
    %285 = vmatpush.msra.mxu0 0.0
    %286 = vmatpush.msra.mxu0 0.0
    %287 = vmatpush.msra.mxu0 0.0
    %288 = vmatpush.msra.mxu0 0.0
    %289 = vmatpush.msra.mxu0 0.0
    %290 = vmatpush.msra.mxu0 0.0
    %291 = vmatpush.msra.mxu0 0.0
    %292 = vmatpush.msra.mxu0 0.0
    %293 = vmatpush.msra.mxu0 0.0
    %294 = vmatpush.msra.mxu0 0.0
    %295 = vmatpush.msra.mxu0 0.0
    %296 = vmatpush.msra.mxu0 %v276
    %297 = vmatmul.f32.gmra.mxu0 %v279
    %v298 = vpop.f32.mrf.mxu0
    %v299 = vadd.f32 0.0, %v298
    %300 = vdwg.mxu0
    %v301 = vadd.f32 %v274, %v299
    %vm302 = vcmask 523264
    %v303 = vsel %vm302, %v301, 0.0
    %v304 = vrot.slane %v303, 4
    %v305 = vadd.f32 %v303, %v304
    %v306 = vrot.slane %v305, 2
    %v307 = vadd.f32 %v305, %v306
    %v308 = vrot.slane %v307, 1
    %v309 = vadd.f32 %v307, %v308
    %v310 = vrcp.pop 8.0
    %v311 = vmul.f32 8.0, %v310
    %v312 = vsub.f32 1.0, %v311
    %v313 = vmul.f32 %v310, %v312
    %v314 = vadd.f32 %v310, %v313
    %vm315 = vweird.f32 %v310
    %v316 = vsel %vm315, %v310, %v314
    %v317 = vmul.f32 %v309, %v316
    %v318 = vsub.f32 %v301, %v317
    %v319 = vmul.f32 %v318, %v318
    %v320 = vsel %vm302, %v319, 0.0
    %v321 = vrot.slane %v320, 4
    %v322 = vadd.f32 %v320, %v321
    %v323 = vrot.slane %v322, 2
    %v324 = vadd.f32 %v322, %v323
    %v325 = vrot.slane %v324, 1
    %v326 = vadd.f32 %v324, %v325
    %v327 = vmul.f32 %v326, %v316
    %v328 = vadd.f32 %v327, 1e-05
    %v329 = vrsqrt.pop %v328
    %v330 = vmul.f32 %v329, %v328
    %v331 = vmul.f32 %v330, %v329
    %v332 = vmul.f32 0.5, %v331
    %v333 = vsub.f32 1.5, %v332
    %v334 = vmul.f32 %v329, %v333
    %vm335 = vweird.f32 %v328
    %vm336 = vweird.f32 %v329
    %vm337 = vmor %vm335, %vm336
    %v338 = vsel %vm337, %v329, %v334
    %v339 = vld [vmem:[#allocation7] sm:$0x1]
    %v340 = vld [vmem:[#allocation7 + $0x1] sm:$0x1]
    %v341 = vmul.f32 %v339, %v338
    %v342 = vperm.slane %v341, 0
    %v343 = vmul.f32 %v318, %v342
    %v344 = vperm.slane %v340, 0
    %v345 = vadd.f32 %v343, %v344
    %v346 = vmax.f32 %v345, 0.0
    %v347 = vld [vmem:[%s8] sm:$0xff]
    %v348 = vld [vmem:[%s8 + $0x8] sm:$0xff]
    %v349 = vld [vmem:[%s8 + $0x10] sm:$0xff]
    %v350 = vld [vmem:[%s8 + $0x18] sm:$0xff]
    %v351 = vld [vmem:[%s8 + $0x20] sm:$0xff]
    %v352 = vld [vmem:[%s8 + $0x28] sm:$0xff]
    %v353 = vld [vmem:[%s8 + $0x30] sm:$0xff]
    %v354 = vld [vmem:[%s8 + $0x38] sm:$0xff]
    %v356 = vsel %vm302, %v346, 0
    %358 = vmatpush.msra.mxu0 0.0
    %359 = vmatpush.msra.mxu0 0.0
    %360 = vmatpush.msra.mxu0 0.0
    %361 = vmatpush.msra.mxu0 0.0
    %362 = vmatpush.msra.mxu0 0.0
    %363 = vmatpush.msra.mxu0 0.0
    %364 = vmatpush.msra.mxu0 0.0
    %365 = vmatpush.msra.mxu0 0.0
    %366 = vmatpush.msra.mxu0 %v354
    %367 = vmatpush.msra.mxu0 %v353
    %368 = vmatpush.msra.mxu0 %v352
    %369 = vmatpush.msra.mxu0 %v351
    %370 = vmatpush.msra.mxu0 %v350
    %371 = vmatpush.msra.mxu0 %v349
    %372 = vmatpush.msra.mxu0 %v348
    %373 = vmatpush.msra.mxu0 %v347
    %374 = vmatmul.f32.gmra.mxu0 %v356
    %v375 = vpop.f32.mrf.mxu0
    %v376 = vadd.f32 0.0, %v375
    %377 = vdwg.mxu0
    %vm378 = vcmask 392192
    %v379 = vsel %vm378, %v376, 0.0
    %v380 = vrot.slane %v379, 4
    %v381 = vadd.f32 %v379, %v380
    %v382 = vrot.slane %v381, 2
    %v383 = vadd.f32 %v381, %v382
    %v384 = vrot.slane %v383, 1
    %v385 = vadd.f32 %v383, %v384
    %v386 = vmul.f32 %v385, %v316
    %v387 = vsub.f32 %v376, %v386
    %v388 = vmul.f32 %v387, %v387
    %v389 = vsel %vm378, %v388, 0.0
    %v390 = vrot.slane %v389, 4
    %v391 = vadd.f32 %v389, %v390
    %v392 = vrot.slane %v391, 2
    %v393 = vadd.f32 %v391, %v392
    %v394 = vrot.slane %v393, 1
    %v395 = vadd.f32 %v393, %v394
    %v396 = vmul.f32 %v395, %v316
    %v397 = vadd.f32 %v396, 1e-05
    %v398 = vrsqrt.pop %v397
    %v399 = vmul.f32 %v398, %v397
    %v400 = vmul.f32 %v399, %v398
    %v401 = vmul.f32 0.5, %v400
    %v402 = vsub.f32 1.5, %v401
    %v403 = vmul.f32 %v398, %v402
    %vm404 = vweird.f32 %v397
    %vm405 = vweird.f32 %v398
    %vm406 = vmor %vm404, %vm405
    %v407 = vsel %vm406, %v398, %v403
    %v408 = vld [vmem:[#allocation8] sm:$0x1]
    %v409 = vld [vmem:[#allocation8 + $0x1] sm:$0x1]
    %v410 = vmul.f32 %v408, %v407
    %v411 = vperm.slane %v410, 0
    %v412 = vmul.f32 %v387, %v411
    %v413 = vperm.slane %v409, 0
    %v414 = vadd.f32 %v412, %v413
    %v415 = vmax.f32 %v414, 0.0
    %v416 = vld [vmem:[%s10] sm:$0xff]
    %v417 = vld [vmem:[%s10 + $0x8] sm:$0xff]
    %v418 = vld [vmem:[%s10 + $0x10] sm:$0xff]
    %v419 = vld [vmem:[%s10 + $0x18] sm:$0xff]
    %v420 = vld [vmem:[%s10 + $0x20] sm:$0xff]
    %v421 = vld [vmem:[%s10 + $0x28] sm:$0xff]
    %v423 = vsel %vm378, %v415, 0
    %425 = vmatpush.msra.mxu0 0.0
    %426 = vmatpush.msra.mxu0 0.0
    %427 = vmatpush.msra.mxu0 0.0
    %428 = vmatpush.msra.mxu0 0.0
    %429 = vmatpush.msra.mxu0 0.0
    %430 = vmatpush.msra.mxu0 0.0
    %431 = vmatpush.msra.mxu0 0.0
    %432 = vmatpush.msra.mxu0 0.0
    %433 = vmatpush.msra.mxu0 0.0
    %434 = vmatpush.msra.mxu0 0.0
    %435 = vmatpush.msra.mxu0 %v421
    %436 = vmatpush.msra.mxu0 %v420
    %437 = vmatpush.msra.mxu0 %v419
    %438 = vmatpush.msra.mxu0 %v418
    %439 = vmatpush.msra.mxu0 %v417
    %440 = vmatpush.msra.mxu0 %v416
    %441 = vmatmul.f32.gmra.mxu0 %v423
    %v442 = vpop.f32.mrf.mxu0
    %v443 = vadd.f32 0.0, %v442
    %444 = vdwg.mxu0
    %vm445 = vcmask 261120
    %v446 = vsel %vm445, %v443, 0.0
    %v447 = vrot.slane %v446, 4
    %v448 = vadd.f32 %v446, %v447
    %v449 = vrot.slane %v448, 2
    %v450 = vadd.f32 %v448, %v449
    %v451 = vrot.slane %v450, 1
    %v452 = vadd.f32 %v450, %v451
    %v453 = vmul.f32 %v452, %v316
    %v454 = vsub.f32 %v443, %v453
    %v455 = vmul.f32 %v454, %v454
    %v456 = vsel %vm445, %v455, 0.0
    %v457 = vrot.slane %v456, 4
    %v458 = vadd.f32 %v456, %v457
    %v459 = vrot.slane %v458, 2
    %v460 = vadd.f32 %v458, %v459
    %v461 = vrot.slane %v460, 1
    %v462 = vadd.f32 %v460, %v461
    %v463 = vmul.f32 %v462, %v316
    %v464 = vadd.f32 %v463, 1e-05
    %v465 = vrsqrt.pop %v464
    %v466 = vmul.f32 %v465, %v464
    %v467 = vmul.f32 %v466, %v465
    %v468 = vmul.f32 0.5, %v467
    %v469 = vsub.f32 1.5, %v468
    %v470 = vmul.f32 %v465, %v469
    %vm471 = vweird.f32 %v464
    %vm472 = vweird.f32 %v465
    %vm473 = vmor %vm471, %vm472
    %v474 = vsel %vm473, %v465, %v470
    %v475 = vld [vmem:[#allocation10] sm:$0x1]
    %v476 = vld [vmem:[#allocation10 + $0x1] sm:$0x1]
    %v477 = vmul.f32 %v475, %v474
    %v478 = vperm.slane %v477, 0
    %v479 = vmul.f32 %v454, %v478
    %v480 = vperm.slane %v476, 0
    %v481 = vadd.f32 %v479, %v480
    %v482 = vmax.f32 %v481, 0.0
    %v483 = vld [vmem:[%s12] sm:$0xff]
    %v484 = vld [vmem:[%s12 + $0x8] sm:$0xff]
    %v485 = vld [vmem:[%s12 + $0x10] sm:$0xff]
    %v486 = vld [vmem:[%s12 + $0x18] sm:$0xff]
    %v487 = vld [vmem:[#allocation11] sm:$0x1]
    %v489 = vperm.slane %v487, 0
    %v492 = vsel %vm445, %v482, 0
    %494 = vmatpush.msra.mxu0 0.0
    %495 = vmatpush.msra.mxu0 0.0
    %496 = vmatpush.msra.mxu0 0.0
    %497 = vmatpush.msra.mxu0 0.0
    %498 = vmatpush.msra.mxu0 0.0
    %499 = vmatpush.msra.mxu0 0.0
    %500 = vmatpush.msra.mxu0 0.0
    %501 = vmatpush.msra.mxu0 0.0
    %502 = vmatpush.msra.mxu0 0.0
    %503 = vmatpush.msra.mxu0 0.0
    %504 = vmatpush.msra.mxu0 0.0
    %505 = vmatpush.msra.mxu0 0.0
    %506 = vmatpush.msra.mxu0 %v486
    %507 = vmatpush.msra.mxu0 %v485
    %508 = vmatpush.msra.mxu0 %v484
    %509 = vmatpush.msra.mxu0 %v483
    %510 = vmatmul.f32.gmra.mxu0 %v492
    %v511 = vpop.f32.mrf.mxu0
    %v512 = vadd.f32 %v489, %v511
    %513 = vdwg.mxu0
    %v514 = vmax.f32 %v512, 0.0
    %vm515 = vcmp.ne.f32.partialorder %v512, %v512
    %v516 = vadd.f32 %v512, 0.0
    %v517 = vand.u32 2147483647, %v512
    %v518 = vsub.f32 0.0, %v517
    %v519 = vmul.f32 %v518, 1.442695
    %v520 = vpow.pop %v519
    %v521 = vadd.f32 %v520, 1.0
    %v522 = vlog2.pop %v521
    %v523 = vmul.f32 %v522, 0.6931472
    %v524 = vmul.f32 -0.5, %v520
    %v525 = vadd.f32 %v524, 1.0
    %v526 = vmul.f32 %v525, %v520
    %v527 = vand.u32 2147483647, %v520
    %vm528 = vcmp.lt.f32.partialorder %v527, 0.0004427343
    %v529 = vsel %vm528, %v526, %v523
    %v530 = vadd.f32 %v514, %v529
    %v531 = vsel %vm515, %v516, %v530
    %532 = vst.msk [vmem:[#allocation20] sm:$0xff] %vm228, %v512
    %534 = vrot.lane.b32.xlu0 %v531, 112
    %v535 = vpop.permute.xlu0 %534
    %537 = vst.msk [vmem:[#allocation22] sm:$0xff] %vm228, %v535
    %v538 = vmul.f32 %v531, 0.5
    %v539 = vmul.f32 %v538, 1.442695
    %v540 = vpow.pop %v539
    %v541 = vld [vmem:[#allocation2] sm:$0xff]
    %543 = vrot.lane.b32.xlu0 %v541, 16
    %v544 = vpop.permute.xlu0 %543
    %v546 = vmul.f32 %v540, %v544
    %548 = vrot.lane.b32.xlu0 %v546, 112
    %v549 = vpop.permute.xlu0 %548
    %v551 = vadd.f32 %v512, %v549
    %v552 = vld [vmem:[%s14] sm:$0xff]
    %v553 = vld [vmem:[%s14 + $0x8] sm:$0xff]
    %v554 = vld [vmem:[%s15] sm:$0xff]
    %v555 = vld [vmem:[%s15 + $0x8] sm:$0xff]
    %556 = vmatpush.msra.mxu0 0.0
    %557 = vmatpush.msra.mxu0 0.0
    %558 = vmatpush.msra.mxu0 0.0
    %559 = vmatpush.msra.mxu0 0.0
    %560 = vmatpush.msra.mxu0 0.0
    %561 = vmatpush.msra.mxu0 0.0
    %562 = vmatpush.msra.mxu0 0.0
    %563 = vmatpush.msra.mxu0 0.0
    %564 = vmatpush.msra.mxu0 0.0
    %565 = vmatpush.msra.mxu0 0.0
    %566 = vmatpush.msra.mxu0 0.0
    %567 = vmatpush.msra.mxu0 0.0
    %568 = vmatpush.msra.mxu0 0.0
    %569 = vmatpush.msra.mxu0 0.0
    %570 = vmatpush.msra.mxu0 %v555
    %571 = vmatpush.msra.mxu0 %v554
    %572 = vmatmul.f32.gmra.mxu0 %v230
    %v573 = vpop.f32.mrf.mxu0
    %v574 = vadd.f32 0.0, %v573
    %575 = vdwg.mxu0
    %v577 = vsel %vm228, %v551, 0
    %579 = vmatpush.msra.mxu0 0.0
    %580 = vmatpush.msra.mxu0 0.0
    %581 = vmatpush.msra.mxu0 0.0
    %582 = vmatpush.msra.mxu0 0.0
    %583 = vmatpush.msra.mxu0 0.0
    %584 = vmatpush.msra.mxu0 0.0
    %585 = vmatpush.msra.mxu0 0.0
    %586 = vmatpush.msra.mxu0 0.0
    %587 = vmatpush.msra.mxu0 0.0
    %588 = vmatpush.msra.mxu0 0.0
    %589 = vmatpush.msra.mxu0 0.0
    %590 = vmatpush.msra.mxu0 0.0
    %591 = vmatpush.msra.mxu0 0.0
    %592 = vmatpush.msra.mxu0 0.0
    %593 = vmatpush.msra.mxu0 %v553
    %594 = vmatpush.msra.mxu0 %v552
    %595 = vmatmul.f32.gmra.mxu0 %v577
    %v596 = vpop.f32.mrf.mxu0
    %v597 = vadd.f32 %v574, %v596
    %598 = vdwg.mxu0
    %v599 = vld [vmem:[#allocation13] sm:$0xff]
    %600 = vmatpush.msra.mxu0 0.0
    %601 = vmatpush.msra.mxu0 0.0
    %602 = vmatpush.msra.mxu0 0.0
    %603 = vmatpush.msra.mxu0 0.0
    %604 = vmatpush.msra.mxu0 0.0
    %605 = vmatpush.msra.mxu0 0.0
    %606 = vmatpush.msra.mxu0 0.0
    %607 = vmatpush.msra.mxu0 0.0
    %608 = vmatpush.msra.mxu0 0.0
    %609 = vmatpush.msra.mxu0 0.0
    %610 = vmatpush.msra.mxu0 0.0
    %611 = vmatpush.msra.mxu0 0.0
    %612 = vmatpush.msra.mxu0 0.0
    %613 = vmatpush.msra.mxu0 0.0
    %614 = vmatpush.msra.mxu0 0.0
    %615 = vmatpush.msra.mxu0 %v599
    %616 = vmatmul.f32.gmra.mxu0 %v279
    %v617 = vpop.f32.mrf.mxu0
    %v618 = vadd.f32 0.0, %v617
    %619 = vdwg.mxu0
    %v620 = vadd.f32 %v597, %v618
    %v621 = vsel %vm445, %v620, 0.0
    %v622 = vrot.slane %v621, 4
    %v623 = vadd.f32 %v621, %v622
    %v624 = vrot.slane %v623, 2
    %v625 = vadd.f32 %v623, %v624
    %v626 = vrot.slane %v625, 1
    %v627 = vadd.f32 %v625, %v626
    %v628 = vmul.f32 %v627, %v316
    %v629 = vsub.f32 %v620, %v628
    %v630 = vmul.f32 %v629, %v629
    %v631 = vsel %vm445, %v630, 0.0
    %v632 = vrot.slane %v631, 4
    %v633 = vadd.f32 %v631, %v632
    %v634 = vrot.slane %v633, 2
    %v635 = vadd.f32 %v633, %v634
    %v636 = vrot.slane %v635, 1
    %v637 = vadd.f32 %v635, %v636
    %v638 = vmul.f32 %v637, %v316
    %v639 = vadd.f32 %v638, 1e-05
    %v640 = vrsqrt.pop %v639
    %v641 = vmul.f32 %v640, %v639
    %v642 = vmul.f32 %v641, %v640
    %v643 = vmul.f32 0.5, %v642
    %v644 = vsub.f32 1.5, %v643
    %v645 = vmul.f32 %v640, %v644
    %vm646 = vweird.f32 %v639
    %vm647 = vweird.f32 %v640
    %vm648 = vmor %vm646, %vm647
    %v649 = vsel %vm648, %v640, %v645
    %v650 = vld [vmem:[#allocation14] sm:$0x1]
    %v651 = vld [vmem:[#allocation14 + $0x1] sm:$0x1]
    %v652 = vmul.f32 %v650, %v649
    %v653 = vperm.slane %v652, 0
    %v654 = vmul.f32 %v629, %v653
    %v655 = vperm.slane %v651, 0
    %v656 = vadd.f32 %v654, %v655
    %v657 = vmax.f32 %v656, 0.0
    %v658 = vld [vmem:[%s18] sm:$0xff]
    %v659 = vld [vmem:[%s18 + $0x8] sm:$0xff]
    %v660 = vld [vmem:[%s18 + $0x10] sm:$0xff]
    %v661 = vld [vmem:[%s18 + $0x18] sm:$0xff]
    %v663 = vsel %vm445, %v657, 0
    %665 = vmatpush.msra.mxu0 0.0
    %666 = vmatpush.msra.mxu0 0.0
    %667 = vmatpush.msra.mxu0 0.0
    %668 = vmatpush.msra.mxu0 0.0
    %669 = vmatpush.msra.mxu0 0.0
    %670 = vmatpush.msra.mxu0 0.0
    %671 = vmatpush.msra.mxu0 0.0
    %672 = vmatpush.msra.mxu0 0.0
    %673 = vmatpush.msra.mxu0 0.0
    %674 = vmatpush.msra.mxu0 0.0
    %675 = vmatpush.msra.mxu0 0.0
    %676 = vmatpush.msra.mxu0 0.0
    %677 = vmatpush.msra.mxu0 %v661
    %678 = vmatpush.msra.mxu0 %v660
    %679 = vmatpush.msra.mxu0 %v659
    %680 = vmatpush.msra.mxu0 %v658
    %681 = vmatmul.f32.gmra.mxu0 %v663
    %v682 = vpop.f32.mrf.mxu0
    %v683 = vadd.f32 0.0, %v682
    %684 = vdwg.mxu0
    %v685 = vsel %vm378, %v683, 0.0
    %v686 = vrot.slane %v685, 4
    %v687 = vadd.f32 %v685, %v686
    %v688 = vrot.slane %v687, 2
    %v689 = vadd.f32 %v687, %v688
    %v690 = vrot.slane %v689, 1
    %v691 = vadd.f32 %v689, %v690
    %v692 = vmul.f32 %v691, %v316
    %v693 = vsub.f32 %v683, %v692
    %v694 = vmul.f32 %v693, %v693
    %v695 = vsel %vm378, %v694, 0.0
    %v696 = vrot.slane %v695, 4
    %v697 = vadd.f32 %v695, %v696
    %v698 = vrot.slane %v697, 2
    %v699 = vadd.f32 %v697, %v698
    %v700 = vrot.slane %v699, 1
    %v701 = vadd.f32 %v699, %v700
    %v702 = vmul.f32 %v701, %v316
    %v703 = vadd.f32 %v702, 1e-05
    %v704 = vrsqrt.pop %v703
    %v705 = vmul.f32 %v704, %v703
    %v706 = vmul.f32 %v705, %v704
    %v707 = vmul.f32 0.5, %v706
    %v708 = vsub.f32 1.5, %v707
    %v709 = vmul.f32 %v704, %v708
    %vm710 = vweird.f32 %v703
    %vm711 = vweird.f32 %v704
    %vm712 = vmor %vm710, %vm711
    %v713 = vsel %vm712, %v704, %v709
    %v714 = vld [vmem:[#allocation16] sm:$0x1]
    %v715 = vld [vmem:[#allocation16 + $0x1] sm:$0x1]
    %v716 = vmul.f32 %v714, %v713
    %v717 = vperm.slane %v716, 0
    %v718 = vmul.f32 %v693, %v717
    %v719 = vperm.slane %v715, 0
    %v720 = vadd.f32 %v718, %v719
    %v721 = vmax.f32 %v720, 0.0
    %v722 = vld [vmem:[%s20] sm:$0xff]
    %v723 = vld [vmem:[%s20 + $0x8] sm:$0xff]
    %v724 = vld [vmem:[%s20 + $0x10] sm:$0xff]
    %v725 = vld [vmem:[%s20 + $0x18] sm:$0xff]
    %v726 = vld [vmem:[%s20 + $0x20] sm:$0xff]
    %v727 = vld [vmem:[%s20 + $0x28] sm:$0xff]
    %v729 = vsel %vm378, %v721, 0
    %731 = vmatpush.msra.mxu0 0.0
    %732 = vmatpush.msra.mxu0 0.0
    %733 = vmatpush.msra.mxu0 0.0
    %734 = vmatpush.msra.mxu0 0.0
    %735 = vmatpush.msra.mxu0 0.0
    %736 = vmatpush.msra.mxu0 0.0
    %737 = vmatpush.msra.mxu0 0.0
    %738 = vmatpush.msra.mxu0 0.0
    %739 = vmatpush.msra.mxu0 0.0
    %740 = vmatpush.msra.mxu0 0.0
    %741 = vmatpush.msra.mxu0 %v727
    %742 = vmatpush.msra.mxu0 %v726
    %743 = vmatpush.msra.mxu0 %v725
    %744 = vmatpush.msra.mxu0 %v724
    %745 = vmatpush.msra.mxu0 %v723
    %746 = vmatpush.msra.mxu0 %v722
    %747 = vmatmul.f32.gmra.mxu0 %v729
    %v748 = vpop.f32.mrf.mxu0
    %v749 = vadd.f32 0.0, %v748
    %750 = vdwg.mxu0
    %v751 = vsel %vm302, %v749, 0.0
    %v752 = vrot.slane %v751, 4
    %v753 = vadd.f32 %v751, %v752
    %v754 = vrot.slane %v753, 2
    %v755 = vadd.f32 %v753, %v754
    %v756 = vrot.slane %v755, 1
    %v757 = vadd.f32 %v755, %v756
    %v758 = vmul.f32 %v757, %v316
    %v759 = vsub.f32 %v749, %v758
    %v760 = vmul.f32 %v759, %v759
    %v761 = vsel %vm302, %v760, 0.0
    %v762 = vrot.slane %v761, 4
    %v763 = vadd.f32 %v761, %v762
    %v764 = vrot.slane %v763, 2
    %v765 = vadd.f32 %v763, %v764
    %v766 = vrot.slane %v765, 1
    %v767 = vadd.f32 %v765, %v766
    %v768 = vmul.f32 %v767, %v316
    %v769 = vadd.f32 %v768, 1e-05
    %v770 = vrsqrt.pop %v769
    %v771 = vmul.f32 %v770, %v769
    %v772 = vmul.f32 %v771, %v770
    %v773 = vmul.f32 0.5, %v772
    %v774 = vsub.f32 1.5, %v773
    %v775 = vmul.f32 %v770, %v774
    %vm776 = vweird.f32 %v769
    %vm777 = vweird.f32 %v770
    %vm778 = vmor %vm776, %vm777
    %v779 = vsel %vm778, %v770, %v775
    %v780 = vld [vmem:[#allocation17] sm:$0x1]
    %v781 = vld [vmem:[#allocation17 + $0x1] sm:$0x1]
    %v782 = vmul.f32 %v780, %v779
    %v783 = vperm.slane %v782, 0
    %v784 = vmul.f32 %v759, %v783
    %v785 = vperm.slane %v781, 0
    %v786 = vadd.f32 %v784, %v785
    %v787 = vmax.f32 %v786, 0.0
    %v788 = vld [vmem:[%s22] sm:$0xff]
    %v789 = vld [vmem:[%s22 + $0x8] sm:$0xff]
    %v790 = vld [vmem:[%s22 + $0x10] sm:$0xff]
    %v791 = vld [vmem:[%s22 + $0x18] sm:$0xff]
    %v792 = vld [vmem:[%s22 + $0x20] sm:$0xff]
    %v793 = vld [vmem:[%s22 + $0x28] sm:$0xff]
    %v794 = vld [vmem:[%s22 + $0x30] sm:$0xff]
    %v795 = vld [vmem:[%s22 + $0x38] sm:$0xff]
    %v796 = vld [vmem:[%s23] sm:$0x1]
    %v798 = vperm.slane %v796, 0
    %v801 = vsel %vm302, %v787, 0
    %803 = vmatpush.msra.mxu0 0.0
    %804 = vmatpush.msra.mxu0 0.0
    %805 = vmatpush.msra.mxu0 0.0
    %806 = vmatpush.msra.mxu0 0.0
    %807 = vmatpush.msra.mxu0 0.0
    %808 = vmatpush.msra.mxu0 0.0
    %809 = vmatpush.msra.mxu0 0.0
    %810 = vmatpush.msra.mxu0 0.0
    %811 = vmatpush.msra.mxu0 %v795
    %812 = vmatpush.msra.mxu0 %v794
    %813 = vmatpush.msra.mxu0 %v793
    %814 = vmatpush.msra.mxu0 %v792
    %815 = vmatpush.msra.mxu0 %v791
    %816 = vmatpush.msra.mxu0 %v790
    %817 = vmatpush.msra.mxu0 %v789
    %818 = vmatpush.msra.mxu0 %v788
    %819 = vmatmul.f32.gmra.mxu0 %v801
    %v820 = vpop.f32.mrf.mxu0
    %v821 = vadd.f32 %v798, %v820
    %822 = vdwg.mxu0
    %v823 = vxor.u32 %v821, 2147483648
    %v824 = vmul.f32 %v823, 1.442695
    %v825 = vpow.pop %v824
    %v826 = vadd.f32 %v825, 1.0
    %v827 = vrcp.pop %v826
    %v828 = vmul.f32 %v826, %v827
    %v829 = vsub.f32 1.0, %v828
    %v830 = vmul.f32 %v827, %v829
    %v831 = vadd.f32 %v827, %v830
    %vm832 = vweird.f32 %v826
    %vm833 = vweird.f32 %v827
    %vm834 = vmor %vm832, %vm833
    %v835 = vsel %vm834, %v827, %v831
    %v836 = vand.u32 2147483647, %v826
    %vm837 = vcmp.eq.f32.partialorder %v836, 8.507059e+37
    %v838 = vand.u32 %v826, 2147483648
    %v839 = vor.u32 1.1754944e-38, %v838
    %v840 = vsel %vm837, %v839, %v835
    %v841 = vmul.f32 1.0, %v840
    %842 = vst.msk [vmem:[#allocation19] sm:$0xff] %vm252, %v841
    // Predicated region
    $region138: #{vae_forward.1} parent=1 // pred_check
      _
    $region139: #{vae_forward.1} parent=1 // pred_check_branch
      %844 = sbr.rel (0) target = $region141
    $region140: #{vae_forward.1} parent=1 // pred_region
      %846 = vsyncadd [#allocation4], 0
      %s848 = sshll.u32 [#allocation19], 4
      %s849 = int_to_ptr.vmem [resolvable:$true] %s848
      %s850 = sshll.u32 %s24, 4
      %s851 = int_to_ptr.hbm [resolvable:$true] %s850
      %853 = dma.vmem_to_hbm [thread:$0]  %s849, 128, %s851, [#allocation4]
    $region141: #{vae_forward.1} parent=1 // pred_fallthru
      _
    // Predicated region
    $region142: #{vae_forward.1} parent=1 // pred_check
      _
    $region143: #{vae_forward.1} parent=1 // pred_check_branch
      %855 = sbr.rel (0) target = $region145
    $region144: #{vae_forward.1} parent=1 // pred_region
      %857 = vsyncadd [#allocation21], 0
      %s859 = sshll.u32 [#allocation20], 4
      %s860 = int_to_ptr.vmem [resolvable:$true] %s859
      %s861 = sshll.u32 %s25, 4
      %s862 = int_to_ptr.hbm [resolvable:$true] %s861
      %864 = dma.vmem_to_hbm [thread:$0]  %s860, 128, %s862, [#allocation21]
    $region145: #{vae_forward.1} parent=1 // pred_fallthru
      _
    // Predicated region
    $region146: #{vae_forward.1} parent=1 // pred_check
      _
    $region147: #{vae_forward.1} parent=1 // pred_check_branch
      %866 = sbr.rel (0) target = $region149
    $region148: #{vae_forward.1} parent=1 // pred_region
      %868 = vsyncadd [#allocation21], 0
      %s870 = sshll.u32 [#allocation22], 4
      %s871 = int_to_ptr.vmem [resolvable:$true] %s870
      %s872 = sshll.u32 %s26, 4
      %s873 = int_to_ptr.hbm [resolvable:$true] %s872
      %875 = dma.vmem_to_hbm [thread:$0]  %s871, 128, %s873, [#allocation21]
    $region149: #{vae_forward.1} parent=1 // pred_fallthru
      _
    // Predicated region
    $region150: #{vae_forward.1} parent=1 // pred_check
      _
    $region151: #{vae_forward.1} parent=1 // pred_check_branch
      %877 = sbr.rel (0) target = $region153
    $region152: #{vae_forward.1} parent=1 // pred_region
      %879 = dma.done [#allocation4], 128
    $region153: #{vae_forward.1} parent=1 // pred_fallthru
      _
    // Predicated region
    $region154: #{vae_forward.1} parent=1 // pred_check
      _
    $region155: #{vae_forward.1} parent=1 // pred_check_branch
      %881 = sbr.rel (0) target = $region157
    $region156: #{vae_forward.1} parent=1 // pred_region
      %883 = dma.done [#allocation21], 128
    $region157: #{vae_forward.1} parent=1 // pred_fallthru
      _
    // Predicated region
    $region158: #{vae_forward.1} parent=1 // pred_check
      _
    $region159: #{vae_forward.1} parent=1 // pred_check_branch
      %885 = sbr.rel (0) target = $region161
    $region160: #{vae_forward.1} parent=1 // pred_region
      %887 = dma.done [#allocation21], 128
    $region161: #{vae_forward.1} parent=1 // pred_fallthru
      _
    %888 = vsyncpa [#allocation3], 1
    %889 = vsyncpa [#allocation6], 1
    %890 = vsyncpa [#allocation9], 1
    %891 = vsyncpa [#allocation12], 1
    %892 = vsyncpa [#allocation15], 1
    %893 = vsyncpa [#allocation18], 1
    %894 = vsyncpa [#allocation4], 1
    %895 = vsyncpa [#allocation21], 1

</llo_original>
